<compile_context>
chip_gen: v6e
topology: v6e:2x2x1
jax: 0.10.0
libtpu: 0.0.40
codegen_flags: <defaults>
</compile_context>

<pallas_src>
import jax
import jax.numpy as jnp
from jax.experimental import pallas as pl
from jax.experimental.pallas import tpu as pltpu


# ----------------------------- helpers --------------------------------------

def _round_up(x, m):
    return ((x + m - 1) // m) * m


def _pick_tile_rows(row_bytes, n_rows, target_bytes=2 * 1024 * 1024, tm_max=1024):
    """Rows per tile: multiple of 8, ~target_bytes per input buffer, capped by problem size."""
    tm = (target_bytes // max(row_bytes, 1)) // 8 * 8
    tm = max(8, min(tm_max, tm))
    return min(tm, _round_up(n_rows, 8))


# ----------------------------- kernels --------------------------------------

def _make_ce_kernel(n_valid, tm):
    def kernel(scores_ref, labels_ref, out_ref):
        i = pl.program_id(0)
        s = scores_ref[...].astype(jnp.float32)                         # (TM, C)
        lbl = labels_ref[...]                                           # (TM, 1) int32

        # numerically stable logsumexp along the class (lane) axis
        m = jnp.max(s, axis=-1, keepdims=True)                          # (TM, 1)
        z = s - m
        lse = jnp.log(jnp.sum(jnp.exp(z), axis=-1, keepdims=True))      # (TM, 1)

        # target logit via one-hot select (no dynamic gather on TPU vregs);
        # nll = lse - z[target]  (no full logp materialization)
        cls = jax.lax.broadcasted_iota(jnp.int32, s.shape, 1)           # (TM, C)
        target_z = jnp.sum(jnp.where(cls == lbl, z, 0.0),
                           axis=-1, keepdims=True)                      # (TM, 1)
        nll = lse - target_z                                            # (TM, 1)

        # mask padded rows of the last tile
        row = i * tm + jax.lax.broadcasted_iota(jnp.int32, nll.shape, 0)
        nll = jnp.where(row < n_valid, nll, 0.0)

        # per-tile partial sum, broadcast into a lane-dense (1, 8, 128) block
        out_ref[...] = jnp.full(out_ref.shape, jnp.sum(nll), jnp.float32)

    return kernel


def _mse_kernel(s_ref, l_ref, out_ref):
    # s_ref / l_ref: (TM, 128) lane-dense blocks; padded tail is zero in both inputs.
    d = s_ref[...].astype(jnp.float32) - l_ref[...].astype(jnp.float32)
    out_ref[...] = jnp.full(out_ref.shape, jnp.sum(d * d), jnp.float32)


# ----------------------------- wrappers -------------------------------------

def cross_entropy_loss_pallas(scores, labels):
    """scores: (N, C) float logits, labels: (N,) int class indices -> scalar f32."""
    n, c = scores.shape
    itemsize = jnp.dtype(scores.dtype).itemsize
    tm = _pick_tile_rows(c * itemsize, n)
    n_pad = _round_up(n, tm)
    num_tiles = n_pad // tm

    scores_p = jnp.pad(scores, ((0, n_pad - n), (0, 0)))
    labels_p = jnp.pad(labels.astype(jnp.int32).reshape(n, 1), ((0, n_pad - n), (0, 0)))

    partials = pl.pallas_call(
        _make_ce_kernel(n, tm),
        out_shape=jax.ShapeDtypeStruct((num_tiles, 8, 128), jnp.float32),
        grid=(num_tiles,),
        in_specs=[
            pl.BlockSpec((tm, c), lambda i: (i, 0)),
            pl.BlockSpec((tm, 1), lambda i: (i, 0)),
        ],
        out_specs=pl.BlockSpec((1, 8, 128), lambda i: (i, 0, 0)),
        compiler_params=pltpu.CompilerParams(dimension_semantics=("parallel",)),
    )(scores_p, labels_p)

    # final tiny reduction + mean (divide by true N) in plain JAX
    return jnp.sum(partials[:, 0, 0]) / n


def mse_loss_pallas(scores, labels):
    """scores, labels: same-shaped float arrays -> scalar f32 mean squared error."""
    total = scores.size
    lane = 128
    rows = pl.cdiv(total, lane)
    itemsize = jnp.dtype(scores.dtype).itemsize
    tm = _pick_tile_rows(lane * itemsize, rows)
    rows_pad = _round_up(rows, tm)
    num_tiles = rows_pad // tm
    padded = rows_pad * lane

    # lane-dense flattening; zero-pad BOTH inputs so the padded tail contributes 0.
    s2d = jnp.pad(scores.reshape(-1), (0, padded - total)).reshape(rows_pad, lane)
    l2d = jnp.pad(labels.reshape(-1).astype(scores.dtype),
                  (0, padded - total)).reshape(rows_pad, lane)

    partials = pl.pallas_call(
        _mse_kernel,
        out_shape=jax.ShapeDtypeStruct((num_tiles, 8, 128), jnp.float32),
        grid=(num_tiles,),
        in_specs=[
            pl.BlockSpec((tm, lane), lambda i: (i, 0)),
            pl.BlockSpec((tm, lane), lambda i: (i, 0)),
        ],
        out_specs=pl.BlockSpec((1, 8, 128), lambda i: (i, 0, 0)),
        compiler_params=pltpu.CompilerParams(dimension_semantics=("parallel",)),
    )(s2d, l2d)

    return jnp.sum(partials[:, 0, 0]) / total


class PointWiseLoss:
    """JAX/Pallas port of the PyTorch PointWiseLoss module (no parameters)."""

    def __init__(self, method='classification'):
        self.method = method

    def __call__(self, graph, scores, labels):
        # `graph` is unused in the reference forward pass.
        # (For genuinely tiny inputs a pure-JAX path would beat any kernel; the
        #  Pallas path is kept unconditional so the kernel is exercised here.)
        if self.method == 'classification':
            return cross_entropy_loss_pallas(scores, labels)  # labels cast to int inside
        return mse_loss_pallas(scores, labels)


# ----------------------------- demo / check ---------------------------------

if __name__ == "__main__":
    key = jax.random.PRNGKey(0)
    k_scores, k_labels, k_targets = jax.random.split(key, 3)

    N, C = 8, 32  # small shapes: batch=8 examples, 32 classes
    scores = jax.random.normal(k_scores, (N, C), dtype=jnp.float32)
    labels = jax.random.randint(k_labels, (N,), 0, C, dtype=jnp.int32)

    loss_fn = PointWiseLoss(method='classification')
    loss = jax.block_until_ready(loss_fn(None, scores, labels))

    # pure-JAX reference (CrossEntropyLoss with mean reduction)
    logp_ref = jax.nn.log_softmax(scores, axis=-1)
    ce_ref = -jnp.mean(logp_ref[jnp.arange(N), labels])
    assert jnp.allclose(loss, ce_ref, atol=1e-5, rtol=1e-5), (loss, ce_ref)

    # regression path (MSELoss) sanity check
    targets = jax.random.normal(k_targets, (N, C), dtype=jnp.float32)
    mse_fn = PointWiseLoss(method='regression')
    mse = jax.block_until_ready(mse_fn(None, scores, targets))
    mse_ref = jnp.mean((scores - targets) ** 2)
    assert jnp.allclose(mse, mse_ref, atol=1e-5, rtol=1e-5), (mse, mse_ref)

    print("KERNEL_OK")
</pallas_src>

<mosaic_0001>
module attributes {stable_mosaic.version = 11 : i64} {
  func.func @kernel(%arg0: i32, %arg1: memref<8x32xf32, #tpu.memory_space<vmem>>, %arg2: memref<8x1xi32, #tpu.memory_space<vmem>>, %arg3: memref<1x8x128xf32, #tpu.memory_space<vmem>>) attributes {dimension_semantics = [#tpu.dimension_semantics<parallel>], iteration_bounds = array<i64: 1>, scalar_prefetch = 0 : i64, scratch_operands = 0 : i64, tpu.core_type = #tpu.core_type<tc>, window_params = [{transform_indices = @transform_0, window_bounds = array<i64: 8, 32>}, {transform_indices = @transform_1, window_bounds = array<i64: 8, 1>}, {transform_indices = @transform_2, window_bounds = array<i64: 1, 8, 128>}]} {
    %c0 = arith.constant 0 : index
    %c0_0 = arith.constant 0 : index
    %0 = vector.load %arg1[%c0, %c0_0] : memref<8x32xf32, #tpu.memory_space<vmem>>, vector<8x32xf32>
    %c0_1 = arith.constant 0 : index
    %c0_2 = arith.constant 0 : index
    %1 = vector.load %arg2[%c0_1, %c0_2] : memref<8x1xi32, #tpu.memory_space<vmem>>, vector<8x1xi32>
    %cst = arith.constant dense<0xFF800000> : vector<8xf32>
    %2 = vector.multi_reduction <maximumf>, %0, %cst [1] : vector<8x32xf32> to vector<8xf32>
    %3 = vector.shape_cast %2 : vector<8xf32> to vector<8x1xf32>
    %4 = vector.broadcast %3 : vector<8x1xf32> to vector<8x32xf32>
    %5 = arith.subf %0, %4 : vector<8x32xf32>
    %6 = math.exp %5 : vector<8x32xf32>
    %cst_3 = arith.constant dense<0.000000e+00> : vector<8xf32>
    %7 = vector.multi_reduction <add>, %6, %cst_3 [1] : vector<8x32xf32> to vector<8xf32>
    %8 = vector.shape_cast %7 : vector<8xf32> to vector<8x1xf32>
    %9 = math.log %8 : vector<8x1xf32>
    %10 = tpu.iota {dimensions = array<i32: 1>} : vector<8x32xi32>
    %11 = vector.broadcast %1 : vector<8x1xi32> to vector<8x32xi32>
    %12 = arith.cmpi eq, %10, %11 : vector<8x32xi32>
    %cst_4 = arith.constant 0.000000e+00 : f32
    %13 = vector.broadcast %cst_4 : f32 to vector<8x32xf32>
    %14 = arith.select %12, %5, %13 : vector<8x32xi1>, vector<8x32xf32>
    %cst_5 = arith.constant dense<0.000000e+00> : vector<8xf32>
    %15 = vector.multi_reduction <add>, %14, %cst_5 [1] : vector<8x32xf32> to vector<8xf32>
    %16 = vector.shape_cast %15 : vector<8xf32> to vector<8x1xf32>
    %17 = arith.subf %9, %16 : vector<8x1xf32>
    %c8_i32 = arith.constant 8 : i32
    %18 = arith.muli %arg0, %c8_i32 : i32
    %19 = tpu.iota {dimensions = array<i32: 0>} : vector<8x1xi32>
    %20 = vector.broadcast %18 : i32 to vector<8x1xi32>
    %21 = arith.addi %20, %19 : vector<8x1xi32>
    %c8_i32_6 = arith.constant 8 : i32
    %22 = vector.broadcast %c8_i32_6 : i32 to vector<8x1xi32>
    %23 = arith.cmpi slt, %21, %22 : vector<8x1xi32>
    %cst_7 = arith.constant 0.000000e+00 : f32
    %24 = vector.broadcast %cst_7 : f32 to vector<8x1xf32>
    %25 = arith.select %23, %17, %24 : vector<8x1xi1>, vector<8x1xf32>
    %26 = vector.shape_cast %25 : vector<8x1xf32> to vector<1x8x1xf32>
    %cst_8 = arith.constant dense<0.000000e+00> : vector<1xf32>
    %27 = vector.multi_reduction <add>, %26, %cst_8 [1, 2] : vector<1x8x1xf32> to vector<1xf32>
    %28 = vector.shape_cast %27 : vector<1xf32> to vector<1x1x1xf32>
    %29 = vector.extract %28[0, 0, 0] : f32 from vector<1x1x1xf32>
    %30 = vector.broadcast %29 : f32 to vector<1x8x128xf32>
    %c0_9 = arith.constant 0 : index
    %c0_10 = arith.constant 0 : index
    %c0_11 = arith.constant 0 : index
    %31 = vector.load %arg3[%c0_9, %c0_10, %c0_11] : memref<1x8x128xf32, #tpu.memory_space<vmem>>, vector<1x8x128xf32>
    tpu.vector_store %arg3[%c0_9, %c0_10, %c0_11], %30 {strides = array<i32>} : memref<1x8x128xf32, #tpu.memory_space<vmem>>, vector<1x8x128xf32>,
    return
  }
  func.func @transform_0(%arg0: i32) -> (i32, i32) {
    %c0_i32 = arith.constant 0 : i32
    %c0_i32_0 = arith.constant 0 : i32
    return %arg0, %c0_i32 : i32, i32
  }
  func.func @transform_1(%arg0: i32) -> (i32, i32) {
    %c0_i32 = arith.constant 0 : i32
    %c0_i32_0 = arith.constant 0 : i32
    return %arg0, %c0_i32 : i32, i32
  }
  func.func @transform_2(%arg0: i32) -> (i32, i32, i32) {
    %c0_i32 = arith.constant 0 : i32
    %c0_i32_0 = arith.constant 0 : i32
    %c0_i32_1 = arith.constant 0 : i32
    return %arg0, %c0_i32, %c0_i32_0 : i32, i32, i32
  }
}

</mosaic_0001>

<llo_original>
// kernel: tpu_custom_call.1
$region0: #{tpu_custom_call.1}
  #allocation0 [shape = 'u32[]', space=smem, size = 0x4, offset = 0x4, fixed_abs, tag = 'smem constant byte address 0x4 - core index']
  #allocation1 [shape = 'u32[144,128]{1,0:T(1,128)}', space=vmem, size = 0x12000, scoped, tag = 'internal scratch']
  %s0 = inlined_call_operand.vmem [shape: f32[8,32], index: 0, kind: input, shape index: {}]
  %s1 = inlined_call_operand.vmem [shape: s32[8,1], index: 1, kind: input, shape index: {}]
  %s2 = inlined_call_operand.hbm [shape: f32[1,8,128], index: 2, kind: output, shape index: {}]
  %s3 = sld [smem:[#allocation0]]
  $region18: #{tpu_custom_call.1} parent=0
    _
  %s5 = ssub.s32 1, %s3
  %s6 = scalar_select 0, %s5, %s3
  $region1: #{tpu_custom_call.1} parent=0
    #allocation2 [shape = 'u8[4096]{0}', space=vmem, size = 0x1000, scoped, tag = 'output window, operand 0, single buffered']
    #allocation3 [shape = 's32[1]{0}', space=sflag, size = 0x4, scoped, tag = 'scoped memory for tpu_custom_call.1']
    %7 = vsyncpa [#allocation3], 0
    // Predicated region
    $region2: #{tpu_custom_call.1} parent=1 // pred_check
      _
    $region3: #{tpu_custom_call.1} parent=1 // pred_check_branch
      %9 = sbr.rel (0) target = $region5
    $region4: #{tpu_custom_call.1} parent=1 // pred_region
      _
    $region5: #{tpu_custom_call.1} parent=1 // pred_fallthru
      _
    // Predicated region
    $region6: #{tpu_custom_call.1} parent=1 // pred_check
      _
    $region7: #{tpu_custom_call.1} parent=1 // pred_check_branch
      %11 = sbr.rel (0) target = $region9
    $region8: #{tpu_custom_call.1} parent=1 // pred_region
      _
    $region9: #{tpu_custom_call.1} parent=1 // pred_fallthru
      _
    %v12 = vld [vmem:[%s0] sm:$0xff]
    %v13 = vld [vmem:[%s1] sm:$0xff]
    %vm14 = vcmask 261120
    %v15 = vsel %vm14, %v12, -inf
    %16 = vmax.xlane.f32.xlu0 %v15
    %v17 = vpop.xlane.xlu0 %16
    %v18 = vsub.f32 %v12, %v17
    %v19 = vmul.f32 %v18, 1.442695
    %v20 = vpow.pop %v19
    %v21 = vsel %vm14, %v20, 0.0
    %22 = vadd.xlane.f32.xlu0 %v21
    %v23 = vpop.xlane.xlu0 %22
    %v24 = vlog2.pop %v23
    %v25 = vmul.f32 %v24, 0.6931472
    %v26 = vlaneseq
    %v27 = vand.u32 %v26, 127
    %28 = vset.pattern.permute.xlu0 0
    %29 = vperm.xlu0 %28, %v13
    %v30 = vpop.permute.xlu0 %29
    %vm31 = vcmp.eq.s32.totalorder %v27, %v30
    %v32 = vsel %vm31, %v18, 0.0
    %v33 = vsel %vm14, %v32, 0.0
    %34 = vadd.xlane.f32.xlu0 %v33
    %v35 = vpop.xlane.xlu0 %34
    %v36 = vsub.f32 %v25, %v35
    %s37 = smul.u32 0, 8
    %v38 = vlaneseq
    %v39 = vshrl.u32 %v38, 7
    %v40 = vstv %s37
    %v41 = vadd.s32 %v40, %v39
    %vm42 = vcmp.lt.s32.totalorder %v41, 8
    %v43 = vsel %vm42, %v36, 0.0
    %vm44 = vcmask 7168
    %v45 = vsel %vm44, %v43, 0.0
    %46 = vadd.xlane.f32.xlu0 %v45
    %v47 = vpop.xlane.xlu0 %46
    %v48 = vrot.slane %v47, 4
    %v49 = vadd.f32 %v47, %v48
    %v50 = vrot.slane %v49, 2
    %v51 = vadd.f32 %v49, %v50
    %v52 = vrot.slane %v51, 1
    %v53 = vadd.f32 %v51, %v52
    %s54 = vtos %v53
    %v55 = vstv %s54
    %56 = vst [vmem:[#allocation2] sm:$0xff] %v55
    // Predicated region
    $region10: #{tpu_custom_call.1} parent=1 // pred_check
      _
    $region11: #{tpu_custom_call.1} parent=1 // pred_check_branch
      %58 = sbr.rel (0) target = $region13
    $region12: #{tpu_custom_call.1} parent=1 // pred_region
      %s60 = ssub.s32 128, 128
      %61 = vsyncadd [#allocation3], %s60
      %s63 = sshll.u32 [#allocation2], 4
      %s64 = int_to_ptr.vmem [resolvable:$true] %s63
      %66 = dma.vmem_to_hbm [thread:$0]  %s64, 128, %s2, [#allocation3]
    $region13: #{tpu_custom_call.1} parent=1 // pred_fallthru
      _
    // Predicated region
    $region14: #{tpu_custom_call.1} parent=1 // pred_check
      _
    $region15: #{tpu_custom_call.1} parent=1 // pred_check_branch
      %68 = sbr.rel (0) target = $region17
    $region16: #{tpu_custom_call.1} parent=1 // pred_region
      %69 = dma.done [#allocation3], 128
    $region17: #{tpu_custom_call.1} parent=1 // pred_fallthru
      _
    %70 = vsyncpa [#allocation3], 1

</llo_original>
